<compile_context>
chip_gen: v7x
topology: tpu7x:2x2x1
jax: 0.10.0
libtpu: 0.0.40
codegen_flags: <defaults>
</compile_context>

<pallas_src>
import functools

import jax
import jax.numpy as jnp
from jax.experimental import pallas as pl
from jax.experimental.pallas import tpu as pltpu

EPS = 1e-5
LANE = 128                      # all hidden/output widths are padded to 128 lanes
VMEM_IO_BUDGET = 8 * 1024 * 1024   # budget for double-buffered f32 x + out tiles


def _round_up(x, m):
    return ((x + m - 1) // m) * m


# ---------------------------------------------------------------------------
# Kernel
# ---------------------------------------------------------------------------
def _mlp_kernel(x_ref, w1_ref, wstack_ref, bstack_ref, o_ref):
    x = x_ref[...].astype(jnp.float32)                     # (TM, F)
    inv_f = jnp.float32(1.0 / x.shape[-1])

    # InstanceNorm over the feature axis (two-pass, biased variance == PyTorch).
    mean = jnp.sum(x, axis=-1, keepdims=True) * inv_f
    xc = x - mean
    var = jnp.sum(xc * xc, axis=-1, keepdims=True) * inv_f
    xn = xc * jax.lax.rsqrt(var + EPS)

    b = bstack_ref[...]                                    # (8, 128) f32, zero-padded

    # bf16 matmul chain with f32 accumulation.  Weights are (in, 128)/(128, 128)
    # zero-padded, so padded lanes stay exactly 0 through the whole chain.
    h = xn.astype(jnp.bfloat16)
    h = jnp.tanh((jnp.dot(h, w1_ref[...],
                          preferred_element_type=jnp.float32) + b[0]
                  ).astype(jnp.bfloat16))
    h = jnp.tanh((jnp.dot(h, wstack_ref[0],
                          preferred_element_type=jnp.float32) + b[1]
                  ).astype(jnp.bfloat16))
    h = jnp.tanh((jnp.dot(h, wstack_ref[1],
                          preferred_element_type=jnp.float32) + b[2]
                  ).astype(jnp.bfloat16))
    h = jnp.tanh((jnp.dot(h, wstack_ref[2],
                          preferred_element_type=jnp.float32) + b[3]
                  ).astype(jnp.bfloat16))
    out = jnp.dot(h, wstack_ref[3],
                  preferred_element_type=jnp.float32) + b[4]

    o_ref[...] = out.astype(o_ref.dtype)                   # lane-dense (TM, 128) f32


# ---------------------------------------------------------------------------
# One-time parameter preparation (transpose / cast / pad / pack)
# ---------------------------------------------------------------------------
def prepare_params(params):
    """params: dict name -> (W, b), PyTorch layout W=(out, in).
    Returns packed, lane-padded, pre-transposed bf16 weight slabs + f32 biases."""
    names = ["fc1", "fc2", "fc3", "fc4", "fc5"]

    def pad_w(W, pad_in=None):                 # (out, in) -> (in[_pad], 128) bf16
        Wt = jnp.asarray(W, jnp.float32).T     # (in, out)
        fi, fo = Wt.shape
        rows = 0 if pad_in is None else pad_in - fi
        return jnp.pad(Wt, ((0, rows), (0, LANE - fo))).astype(jnp.bfloat16)

    w1 = pad_w(params["fc1"][0])                                      # (F, 128)
    wstack = jnp.stack([pad_w(params[n][0], LANE) for n in names[1:]])  # (4,128,128)

    def pad_b(bias):
        bias = jnp.asarray(bias, jnp.float32)
        return jnp.pad(bias, (0, LANE - bias.shape[0]))

    brows = [pad_b(params[n][1]) for n in names]
    brows += [jnp.zeros((LANE,), jnp.float32)] * (8 - len(brows))
    bstack = jnp.stack(brows)                                         # (8, 128)

    out_size = int(params["fc5"][0].shape[0])
    return {"w1": w1, "wstack": wstack, "bstack": bstack, "out_size": out_size}


# ---------------------------------------------------------------------------
# Tiling heuristic
# ---------------------------------------------------------------------------
def _choose_tile(B, F, max_tile_rows):
    # Cap so double-buffered f32 x (tm*F*4) + out (tm*128*4) tiles fit the budget.
    cap = VMEM_IO_BUDGET // (2 * (F + LANE) * 4)
    cap = max(256, (cap // 256) * 256)
    if B <= 256:
        return B                            # single full-array block
    # >=2 grid steps so v7x's two TensorCores both get work; MXU-friendly M.
    tm = _round_up(-(-B // 2), 256)
    return max(256, min(tm, max_tile_rows, cap))


# ---------------------------------------------------------------------------
# Forward wrapper
# ---------------------------------------------------------------------------
@functools.partial(jax.jit, static_argnames=("out_size", "max_tile_rows"))
def build_network_small_forward(x, w1, wstack, bstack, *, out_size,
                                max_tile_rows=4096):
    """x: (B, F).  w1/wstack/bstack: outputs of prepare_params."""
    x = x.astype(jnp.float32)
    B, F = x.shape
    tm = _choose_tile(B, F, max_tile_rows)
    grid = (pl.cdiv(B, tm),)

    out = pl.pallas_call(
        _mlp_kernel,
        out_shape=jax.ShapeDtypeStruct((B, LANE), jnp.float32),
        grid=grid,
        in_specs=[
            pl.BlockSpec((tm, F), lambda i: (i, 0)),            # x: tiled over batch
            pl.BlockSpec((F, LANE), lambda i: (0, 0)),          # w1: resident
            pl.BlockSpec((4, LANE, LANE), lambda i: (0, 0, 0)),  # w2..w5: resident
            pl.BlockSpec((8, LANE), lambda i: (0, 0)),          # biases: resident
        ],
        out_specs=pl.BlockSpec((tm, LANE), lambda i: (i, 0)),
        compiler_params=pltpu.CompilerParams(
            dimension_semantics=("parallel",),                  # v7x dual-TC sharding
            vmem_limit_bytes=32 * 1024 * 1024),                 # raise v5e 16 MiB default
    )(x, w1, wstack, bstack)

    return out[:, :out_size]                                    # fused inside the jit


def forward(x, prep):
    return build_network_small_forward(x, prep["w1"], prep["wstack"],
                                       prep["bstack"], out_size=prep["out_size"])


# ---------------------------------------------------------------------------
# Test harness
# ---------------------------------------------------------------------------
def _init_params(key, input_size, output_size):
    """Deterministic PyTorch-Linear-style init (uniform +/- 1/sqrt(fan_in))."""
    sizes = [(input_size, 16), (16, 16), (16, 16), (16, 8), (8, output_size)]
    names = ["fc1", "fc2", "fc3", "fc4", "fc5"]
    params = {}
    for name, (fan_in, fan_out) in zip(names, sizes):
        key, kw, kb = jax.random.split(key, 3)
        bound = 1.0 / jnp.sqrt(fan_in)
        W = jax.random.uniform(kw, (fan_out, fan_in), jnp.float32, -bound, bound)
        b = jax.random.uniform(kb, (fan_out,), jnp.float32, -bound, bound)
        params[name] = (W, b)
    return params


def _reference_forward(x, params):
    """Pure-JAX f32 reference (PyTorch semantics) for correctness checking."""
    mean = jnp.mean(x, axis=-1, keepdims=True)
    var = jnp.mean((x - mean) ** 2, axis=-1, keepdims=True)
    h = (x - mean) / jnp.sqrt(var + EPS)
    for i, name in enumerate(["fc1", "fc2", "fc3", "fc4", "fc5"]):
        W, b = params[name]
        h = h @ W.T + b
        if i < 4:
            h = jnp.tanh(h)
    return h


if __name__ == "__main__":
    key = jax.random.PRNGKey(0)
    k_x1, k_x2, k_p = jax.random.split(key, 3)

    input_size = 32
    output_size = 4
    params = _init_params(k_p, input_size, output_size)
    prep = prepare_params(params)

    # Tolerance reflects the intentional bf16 matmul/tanh chain (f32 accumulate).
    TOL = dict(atol=3e-2, rtol=3e-2)

    # Case 1: tiny batch (single full-array block).
    x_small = jax.random.normal(k_x1, (8, input_size), jnp.float32)
    out_small = jax.block_until_ready(forward(x_small, prep))
    ref_small = _reference_forward(x_small, params)
    assert out_small.shape == (8, output_size)
    assert jnp.allclose(out_small, ref_small, **TOL), \
        "mismatch vs reference (small batch)"

    # Case 2: batch that is not a tile multiple -> exercises multi-step grid
    # with a masked partial last tile (tm=256, grid=(2,), 300 rows).
    x_big = jax.random.normal(k_x2, (300, input_size), jnp.float32)
    out_big = jax.block_until_ready(forward(x_big, prep))
    ref_big = _reference_forward(x_big, params)
    assert out_big.shape == (300, output_size)
    assert jnp.allclose(out_big, ref_big, **TOL), \
        "mismatch vs reference (tiled batch, partial last tile)"
    assert jnp.all(jnp.isfinite(out_big)), "non-finite values in output"

    print("KERNEL_OK")
</pallas_src>

<mosaic_0001>
module attributes {stable_mosaic.version = 11 : i64} {
  func.func @_mlp_kernel(%arg0: i32, %arg1: memref<8x32xf32, #tpu.memory_space<vmem>>, %arg2: memref<32x128xbf16, #tpu.memory_space<vmem>>, %arg3: memref<4x128x128xbf16, #tpu.memory_space<vmem>>, %arg4: memref<8x128xf32, #tpu.memory_space<vmem>>, %arg5: memref<8x128xf32, #tpu.memory_space<vmem>>) attributes {dimension_semantics = [#tpu.dimension_semantics<parallel>], iteration_bounds = array<i64: 1>, scalar_prefetch = 0 : i64, scratch_operands = 0 : i64, tpu.core_type = #tpu.core_type<tc>, window_params = [{transform_indices = @transform_0, window_bounds = array<i64: 8, 32>}, {pipeline_mode = #tpu.pipeline_mode<synchronous>, transform_indices = @transform_1, window_bounds = array<i64: 32, 128>}, {pipeline_mode = #tpu.pipeline_mode<synchronous>, transform_indices = @transform_2, window_bounds = array<i64: 4, 128, 128>}, {pipeline_mode = #tpu.pipeline_mode<synchronous>, transform_indices = @transform_3, window_bounds = array<i64: 8, 128>}, {transform_indices = @transform_4, window_bounds = array<i64: 8, 128>}]} {
    %c0 = arith.constant 0 : index
    %c0_0 = arith.constant 0 : index
    %0 = vector.load %arg1[%c0, %c0_0] : memref<8x32xf32, #tpu.memory_space<vmem>>, vector<8x32xf32>
    %cst = arith.constant dense<0.000000e+00> : vector<8xf32>
    %1 = vector.multi_reduction <add>, %0, %cst [1] : vector<8x32xf32> to vector<8xf32>
    %2 = vector.shape_cast %1 : vector<8xf32> to vector<8x1xf32>
    %cst_1 = arith.constant 3.125000e-02 : f32
    %3 = vector.broadcast %cst_1 : f32 to vector<8x1xf32>
    %4 = arith.mulf %2, %3 : vector<8x1xf32>
    %5 = vector.broadcast %4 : vector<8x1xf32> to vector<8x32xf32>
    %6 = arith.subf %0, %5 : vector<8x32xf32>
    %7 = arith.mulf %6, %6 : vector<8x32xf32>
    %cst_2 = arith.constant dense<0.000000e+00> : vector<8xf32>
    %8 = vector.multi_reduction <add>, %7, %cst_2 [1] : vector<8x32xf32> to vector<8xf32>
    %9 = vector.shape_cast %8 : vector<8xf32> to vector<8x1xf32>
    %cst_3 = arith.constant 3.125000e-02 : f32
    %10 = vector.broadcast %cst_3 : f32 to vector<8x1xf32>
    %11 = arith.mulf %9, %10 : vector<8x1xf32>
    %cst_4 = arith.constant 9.99999974E-6 : f32
    %12 = vector.broadcast %cst_4 : f32 to vector<8x1xf32>
    %13 = arith.addf %11, %12 : vector<8x1xf32>
    %14 = math.rsqrt %13 : vector<8x1xf32>
    %15 = vector.broadcast %14 : vector<8x1xf32> to vector<8x32xf32>
    %16 = arith.mulf %6, %15 : vector<8x32xf32>
    %c0_5 = arith.constant 0 : index
    %c0_6 = arith.constant 0 : index
    %17 = vector.load %arg4[%c0_5, %c0_6] : memref<8x128xf32, #tpu.memory_space<vmem>>, vector<8x128xf32>
    %18 = arith.truncf %16 : vector<8x32xf32> to vector<8x32xbf16>
    %c0_7 = arith.constant 0 : index
    %c0_8 = arith.constant 0 : index
    %19 = vector.load %arg2[%c0_7, %c0_8] : memref<32x128xbf16, #tpu.memory_space<vmem>>, vector<32x128xbf16>
    %cst_9 = arith.constant dense<0.000000e+00> : vector<8x128xf32>
    %20 = tpu.matmul %18, %19, %cst_9 {dimension_numbers = #tpu.dot_dimension_numbers<[1], [0], [0], [1], [0, 0, 1, 1], [], []>} : vector<8x32xbf16>, vector<32x128xbf16>, vector<8x128xf32> -> vector<8x128xf32>
    %21 = vector.extract_strided_slice %17 {offsets = [0, 0], sizes = [1, 128], strides = [1, 1]} : vector<8x128xf32> to vector<1x128xf32>
    %22 = vector.shape_cast %21 : vector<1x128xf32> to vector<128xf32>
    %23 = vector.shape_cast %22 : vector<128xf32> to vector<1x128xf32>
    %24 = vector.broadcast %23 : vector<1x128xf32> to vector<8x128xf32>
    %25 = arith.addf %20, %24 : vector<8x128xf32>
    %26 = arith.truncf %25 : vector<8x128xf32> to vector<8x128xbf16>
    %27 = math.tanh %26 : vector<8x128xbf16>
    %c0_10 = arith.constant 0 : index
    %c0_11 = arith.constant 0 : index
    %c0_12 = arith.constant 0 : index
    %28 = vector.load %arg3[%c0_10, %c0_11, %c0_12] : memref<4x128x128xbf16, #tpu.memory_space<vmem>>, vector<1x128x128xbf16>
    %29 = vector.shape_cast %28 : vector<1x128x128xbf16> to vector<128x128xbf16>
    %cst_13 = arith.constant dense<0.000000e+00> : vector<8x128xf32>
    %30 = tpu.matmul %27, %29, %cst_13 {dimension_numbers = #tpu.dot_dimension_numbers<[1], [0], [0], [1], [0, 0, 1, 1], [], []>} : vector<8x128xbf16>, vector<128x128xbf16>, vector<8x128xf32> -> vector<8x128xf32>
    %31 = vector.extract_strided_slice %17 {offsets = [1, 0], sizes = [1, 128], strides = [1, 1]} : vector<8x128xf32> to vector<1x128xf32>
    %32 = vector.shape_cast %31 : vector<1x128xf32> to vector<128xf32>
    %33 = vector.shape_cast %32 : vector<128xf32> to vector<1x128xf32>
    %34 = vector.broadcast %33 : vector<1x128xf32> to vector<8x128xf32>
    %35 = arith.addf %30, %34 : vector<8x128xf32>
    %36 = arith.truncf %35 : vector<8x128xf32> to vector<8x128xbf16>
    %37 = math.tanh %36 : vector<8x128xbf16>
    %c1 = arith.constant 1 : index
    %c0_14 = arith.constant 0 : index
    %c0_15 = arith.constant 0 : index
    %38 = vector.load %arg3[%c1, %c0_14, %c0_15] : memref<4x128x128xbf16, #tpu.memory_space<vmem>>, vector<1x128x128xbf16>
    %39 = vector.shape_cast %38 : vector<1x128x128xbf16> to vector<128x128xbf16>
    %cst_16 = arith.constant dense<0.000000e+00> : vector<8x128xf32>
    %40 = tpu.matmul %37, %39, %cst_16 {dimension_numbers = #tpu.dot_dimension_numbers<[1], [0], [0], [1], [0, 0, 1, 1], [], []>} : vector<8x128xbf16>, vector<128x128xbf16>, vector<8x128xf32> -> vector<8x128xf32>
    %41 = vector.extract_strided_slice %17 {offsets = [2, 0], sizes = [1, 128], strides = [1, 1]} : vector<8x128xf32> to vector<1x128xf32>
    %42 = vector.shape_cast %41 : vector<1x128xf32> to vector<128xf32>
    %43 = vector.shape_cast %42 : vector<128xf32> to vector<1x128xf32>
    %44 = vector.broadcast %43 : vector<1x128xf32> to vector<8x128xf32>
    %45 = arith.addf %40, %44 : vector<8x128xf32>
    %46 = arith.truncf %45 : vector<8x128xf32> to vector<8x128xbf16>
    %47 = math.tanh %46 : vector<8x128xbf16>
    %c2 = arith.constant 2 : index
    %c0_17 = arith.constant 0 : index
    %c0_18 = arith.constant 0 : index
    %48 = vector.load %arg3[%c2, %c0_17, %c0_18] : memref<4x128x128xbf16, #tpu.memory_space<vmem>>, vector<1x128x128xbf16>
    %49 = vector.shape_cast %48 : vector<1x128x128xbf16> to vector<128x128xbf16>
    %cst_19 = arith.constant dense<0.000000e+00> : vector<8x128xf32>
    %50 = tpu.matmul %47, %49, %cst_19 {dimension_numbers = #tpu.dot_dimension_numbers<[1], [0], [0], [1], [0, 0, 1, 1], [], []>} : vector<8x128xbf16>, vector<128x128xbf16>, vector<8x128xf32> -> vector<8x128xf32>
    %51 = vector.extract_strided_slice %17 {offsets = [3, 0], sizes = [1, 128], strides = [1, 1]} : vector<8x128xf32> to vector<1x128xf32>
    %52 = vector.shape_cast %51 : vector<1x128xf32> to vector<128xf32>
    %53 = vector.shape_cast %52 : vector<128xf32> to vector<1x128xf32>
    %54 = vector.broadcast %53 : vector<1x128xf32> to vector<8x128xf32>
    %55 = arith.addf %50, %54 : vector<8x128xf32>
    %56 = arith.truncf %55 : vector<8x128xf32> to vector<8x128xbf16>
    %57 = math.tanh %56 : vector<8x128xbf16>
    %c3 = arith.constant 3 : index
    %c0_20 = arith.constant 0 : index
    %c0_21 = arith.constant 0 : index
    %58 = vector.load %arg3[%c3, %c0_20, %c0_21] : memref<4x128x128xbf16, #tpu.memory_space<vmem>>, vector<1x128x128xbf16>
    %59 = vector.shape_cast %58 : vector<1x128x128xbf16> to vector<128x128xbf16>
    %cst_22 = arith.constant dense<0.000000e+00> : vector<8x128xf32>
    %60 = tpu.matmul %57, %59, %cst_22 {dimension_numbers = #tpu.dot_dimension_numbers<[1], [0], [0], [1], [0, 0, 1, 1], [], []>} : vector<8x128xbf16>, vector<128x128xbf16>, vector<8x128xf32> -> vector<8x128xf32>
    %61 = vector.extract_strided_slice %17 {offsets = [4, 0], sizes = [1, 128], strides = [1, 1]} : vector<8x128xf32> to vector<1x128xf32>
    %62 = vector.shape_cast %61 : vector<1x128xf32> to vector<128xf32>
    %63 = vector.shape_cast %62 : vector<128xf32> to vector<1x128xf32>
    %64 = vector.broadcast %63 : vector<1x128xf32> to vector<8x128xf32>
    %65 = arith.addf %60, %64 : vector<8x128xf32>
    %c0_23 = arith.constant 0 : index
    %c0_24 = arith.constant 0 : index
    %66 = vector.load %arg5[%c0_23, %c0_24] : memref<8x128xf32, #tpu.memory_space<vmem>>, vector<8x128xf32>
    tpu.vector_store %arg5[%c0_23, %c0_24], %65 {strides = array<i32>} : memref<8x128xf32, #tpu.memory_space<vmem>>, vector<8x128xf32>,
    return
  }
  func.func @transform_0(%arg0: i32) -> (i32, i32) {
    %c0_i32 = arith.constant 0 : i32
    %c0_i32_0 = arith.constant 0 : i32
    return %arg0, %c0_i32 : i32, i32
  }
  func.func @transform_1(%arg0: i32) -> (i32, i32) {
    %c0_i32 = arith.constant 0 : i32
    %c0_i32_0 = arith.constant 0 : i32
    %c0_i32_1 = arith.constant 0 : i32
    return %c0_i32, %c0_i32_0 : i32, i32
  }
  func.func @transform_2(%arg0: i32) -> (i32, i32, i32) {
    %c0_i32 = arith.constant 0 : i32
    %c0_i32_0 = arith.constant 0 : i32
    %c0_i32_1 = arith.constant 0 : i32
    %c0_i32_2 = arith.constant 0 : i32
    return %c0_i32, %c0_i32_0, %c0_i32_1 : i32, i32, i32
  }
  func.func @transform_3(%arg0: i32) -> (i32, i32) {
    %c0_i32 = arith.constant 0 : i32
    %c0_i32_0 = arith.constant 0 : i32
    %c0_i32_1 = arith.constant 0 : i32
    return %c0_i32, %c0_i32_0 : i32, i32
  }
  func.func @transform_4(%arg0: i32) -> (i32, i32) {
    %c0_i32 = arith.constant 0 : i32
    %c0_i32_0 = arith.constant 0 : i32
    return %arg0, %c0_i32 : i32, i32
  }
}

</mosaic_0001>

<llo_original>
// kernel: build_network_small_forward.1
$region0: #{build_network_small_forward.1}
  #allocation0 [shape = 'u32[]', space=smem, size = 0x4, offset = 0x4, fixed_abs, tag = 'smem constant byte address 0x4 - core index']
  #allocation1 [shape = 'u32[144,128]{1,0:T(1,128)}', space=vmem, size = 0x12000, scoped, tag = 'internal scratch']
  %s0 = inlined_call_operand.hbm [shape: f32[8,32], index: 0, kind: input, shape index: {}]
  %s1 = inlined_call_operand.hbm [shape: bf16[32,128], index: 1, kind: input, shape index: {}]
  %s2 = inlined_call_operand.hbm [shape: bf16[4,128,128], index: 2, kind: input, shape index: {}]
  %s3 = inlined_call_operand.vmem [shape: f32[8,128], index: 3, kind: input, shape index: {}]
  %s4 = inlined_call_operand.vmem [shape: f32[8,128], index: 4, kind: output, shape index: {}]
  %s5 = sld [smem:[#allocation0]]
  $region38: #{build_network_small_forward.1} parent=0
    _
  %s7 = ssub.s32 1, %s5
  %s8 = scalar_select 0, %s7, %s5
  $region1: #{build_network_small_forward.1} parent=0
    #allocation2 [shape = 'u8[4096]{0}', space=vmem, size = 0x1000, scoped, tag = 'input window, operand 0, single buffered']
    #allocation3 [shape = 's32[1]{0}', space=sflag, size = 0x4, scoped, tag = 'scoped memory for build_network_small_forward.1']
    #allocation4 [shape = 'u8[8192]{0}', space=vmem, size = 0x2000, scoped, tag = 'input window, operand 1, single buffered']
    #allocation5 [shape = 's32[1]{0}', space=sflag, size = 0x4, scoped, tag = 'scoped memory for build_network_small_forward.1']
    #allocation6 [shape = 'u8[131072]{0}', space=vmem, size = 0x20000, scoped, tag = 'input window, operand 2, single buffered']
    %9 = vsyncpa [#allocation3], 0
    %10 = vsyncpa [#allocation5], 0
    // Predicated region
    $region2: #{build_network_small_forward.1} parent=1 // pred_check
      _
    $region3: #{build_network_small_forward.1} parent=1 // pred_check_branch
      %12 = sbr.rel (0) target = $region5
    $region4: #{build_network_small_forward.1} parent=1 // pred_region
      %s14 = ssub.s32 128, 128
      %15 = vsyncadd [#allocation3], %s14
      %s17 = sshll.u32 [#allocation2], 4
      %s18 = int_to_ptr.vmem [resolvable:$true] %s17
      %20 = dma.hbm_to_vmem [thread:$0]  %s0, 128, %s18, [#allocation3]
    $region5: #{build_network_small_forward.1} parent=1 // pred_fallthru
      _
    // Predicated region
    $region6: #{build_network_small_forward.1} parent=1 // pred_check
      _
    $region7: #{build_network_small_forward.1} parent=1 // pred_check_branch
      %22 = sbr.rel (0) target = $region9
    $region8: #{build_network_small_forward.1} parent=1 // pred_region
      %s24 = ssub.s32 256, 256
      %25 = vsyncadd [#allocation5], %s24
      %s26 = sshll.u32 [#allocation4], 4
      %s27 = int_to_ptr.vmem [resolvable:$true] %s26
      %32 = dma.hbm_to_vmem [thread:$0]  %s1, 256, %s27, [#allocation5], 64, 64, 4
    $region9: #{build_network_small_forward.1} parent=1 // pred_fallthru
      _
    // Predicated region
    $region10: #{build_network_small_forward.1} parent=1 // pred_check
      _
    $region11: #{build_network_small_forward.1} parent=1 // pred_check_branch
      %34 = sbr.rel (0) target = $region13
    $region12: #{build_network_small_forward.1} parent=1 // pred_region
      %s36 = ssub.s32 4096, 4096
      %37 = vsyncadd [#allocation5], %s36
      %s38 = sshll.u32 [#allocation6], 4
      %s39 = int_to_ptr.vmem [resolvable:$true] %s38
      %44 = dma.hbm_to_vmem [thread:$0]  %s2, 4096, %s39, [#allocation5], 64, 64, 4
    $region13: #{build_network_small_forward.1} parent=1 // pred_fallthru
      _
    // Predicated region
    $region14: #{build_network_small_forward.1} parent=1 // pred_check
      _
    $region15: #{build_network_small_forward.1} parent=1 // pred_check_branch
      %46 = sbr.rel (0) target = $region17
    $region16: #{build_network_small_forward.1} parent=1 // pred_region
      _
    $region17: #{build_network_small_forward.1} parent=1 // pred_fallthru
      _
    // Predicated region
    $region18: #{build_network_small_forward.1} parent=1 // pred_check
      _
    $region19: #{build_network_small_forward.1} parent=1 // pred_check_branch
      %48 = sbr.rel (0) target = $region21
    $region20: #{build_network_small_forward.1} parent=1 // pred_region
      %49 = dma.done [#allocation3], 128
    $region21: #{build_network_small_forward.1} parent=1 // pred_fallthru
      _
    // Predicated region
    $region22: #{build_network_small_forward.1} parent=1 // pred_check
      _
    $region23: #{build_network_small_forward.1} parent=1 // pred_check_branch
      %51 = sbr.rel (0) target = $region25
    $region24: #{build_network_small_forward.1} parent=1 // pred_region
      %52 = dma.done [#allocation5], 256
    $region25: #{build_network_small_forward.1} parent=1 // pred_fallthru
      _
    // Predicated region
    $region26: #{build_network_small_forward.1} parent=1 // pred_check
      _
    $region27: #{build_network_small_forward.1} parent=1 // pred_check_branch
      %54 = sbr.rel (0) target = $region29
    $region28: #{build_network_small_forward.1} parent=1 // pred_region
      %55 = dma.done [#allocation5], 4096
    $region29: #{build_network_small_forward.1} parent=1 // pred_fallthru
      _
    %v57 = vld [vmem:[#allocation2] sm:$0xff]
    %vm58 = vcmask 261120
    %v59 = vsel %vm58, %v57, 0.0
    %60 = vadd.xlane.f32.xlu0 %v59
    %v61 = vpop.xlane.xlu0 %60
    %v62 = vmul.f32 %v61, 0.03125
    %v63 = vsub.f32 %v57, %v62
    %v64 = vmul.f32 %v63, %v63
    %v65 = vsel %vm58, %v64, 0.0
    %66 = vadd.xlane.f32.xlu0 %v65
    %v67 = vpop.xlane.xlu0 %66
    %v68 = vmul.f32 %v67, 0.03125
    %v69 = vadd.f32 %v68, 1e-05
    %v70 = vrsqrt.pop %v69
    %v71 = vmul.f32 %v63, %v70
    %v72 = vld [vmem:[%s3] sm:$0xff]
    %v73 = vpack.c.bf16 %v71, %v71
    %v74 = vld [vmem:[#allocation4] sm:$0xf]
    %v75 = vld [vmem:[#allocation4 + $0x4] sm:$0xf]
    %v76 = vld [vmem:[#allocation4 + $0x8] sm:$0xf]
    %v77 = vld [vmem:[#allocation4 + $0xc] sm:$0xf]
    %v78 = vlaneseq
    %v79 = vshrl.u32 %v78, 7
    %v80 = vsub.s32 0, %v79
    %v81 = vrot.slane %v72, %v80
    %v86 = vunpack.c.l.b16 %v74
    %v87 = vunpack.c.l.b16 %v75
    %v88 = vunpack.c.l.b16 %v76
    %v89 = vunpack.c.l.b16 %v77
    %v90 = vpack.c.b16 %v87, %v86
    %v91 = vpack.c.b16 %v89, %v88
    %v95 = vsel %vm58, %v73, 0
    %97 = vmatprep.subr.bf16.mxu0 0
    %98 = vmatpush1.bf16.msra.mxu0 %v90
    %99 = vmatprep.subr.bf16.mxu0 0
    %100 = vmatpush1.bf16.msra.mxu0 %v91
    %101 = vmatprep.subr.bf16.mxu0 0
    %102 = vmatpush1.bf16.msra.mxu0 0
    %103 = vmatprep.subr.bf16.mxu0 0
    %104 = vmatpush1.bf16.msra.mxu0 0
    %105 = vmatprep.subr.bf16.mxu0 0
    %106 = vmatpush1.bf16.msra.mxu0 0
    %107 = vmatprep.subr.bf16.mxu0 0
    %108 = vmatpush1.bf16.msra.mxu0 0
    %109 = vmatprep.subr.bf16.mxu0 0
    %110 = vmatpush1.bf16.msra.mxu0 0
    %111 = vmatprep.subr.bf16.mxu0 0
    %112 = vmatpush1.bf16.msra.mxu0 0
    %113 = vmatprep.subr.bf16.mxu0 0
    %114 = vmatpush1.bf16.msra.mxu0 0
    %115 = vmatprep.subr.bf16.mxu0 0
    %116 = vmatpush1.bf16.msra.mxu0 0
    %117 = vmatprep.subr.bf16.mxu0 0
    %118 = vmatpush1.bf16.msra.mxu0 0
    %119 = vmatprep.subr.bf16.mxu0 0
    %120 = vmatpush1.bf16.msra.mxu0 0
    %121 = vmatprep.subr.bf16.mxu0 0
    %122 = vmatpush1.bf16.msra.mxu0 0
    %123 = vmatprep.subr.bf16.mxu0 0
    %124 = vmatpush1.bf16.msra.mxu0 0
    %125 = vmatprep.subr.bf16.mxu0 0
    %126 = vmatpush1.bf16.msra.mxu0 0
    %127 = vmatprep.subr.bf16.mxu0 0
    %128 = vmatpush1.bf16.msra.mxu0 0
    %129 = vmatprep.mubr.bf16.mxu0 0
    %130 = vmatmul.mubr.bf16.gmra.mrb[0].mxu0 %v95
    %v131 = vpop.f32.mrb[0].mxu0
    %v132 = vadd.f32 %v81, %v131
    %v133 = vpop.f32.mrb[0].mxu0
    %v134 = vpop.f32.mrb[0].mxu0
    %v135 = vpop.f32.mrb[0].mxu0
    %136 = vdwg.mxu0
    %v137 = vpack.c.bf16 %v132, %v132
    %v138 = vtanh.bf16.pop %v137
    %v139 = vld [vmem:[#allocation6] sm:$0xf]
    %v140 = vld [vmem:[#allocation6 + $0x4] sm:$0xf]
    %v141 = vld [vmem:[#allocation6 + $0x8] sm:$0xf]
    %v142 = vld [vmem:[#allocation6 + $0xc] sm:$0xf]
    %v143 = vld [vmem:[#allocation6 + $0x10] sm:$0xf]
    %v144 = vld [vmem:[#allocation6 + $0x14] sm:$0xf]
    %v145 = vld [vmem:[#allocation6 + $0x18] sm:$0xf]
    %v146 = vld [vmem:[#allocation6 + $0x1c] sm:$0xf]
    %v147 = vld [vmem:[#allocation6 + $0x20] sm:$0xf]
    %v148 = vld [vmem:[#allocation6 + $0x24] sm:$0xf]
    %v149 = vld [vmem:[#allocation6 + $0x28] sm:$0xf]
    %v150 = vld [vmem:[#allocation6 + $0x2c] sm:$0xf]
    %v151 = vld [vmem:[#allocation6 + $0x30] sm:$0xf]
    %v152 = vld [vmem:[#allocation6 + $0x34] sm:$0xf]
    %v153 = vld [vmem:[#allocation6 + $0x38] sm:$0xf]
    %v154 = vld [vmem:[#allocation6 + $0x3c] sm:$0xf]
    %v155 = vlaneseq
    %v156 = vshrl.u32 %v155, 7
    %v157 = vsub.s32 1, %v156
    %v158 = vrot.slane %v72, %v157
    %v175 = vunpack.c.l.b16 %v139
    %v176 = vunpack.c.l.b16 %v140
    %v177 = vunpack.c.l.b16 %v141
    %v178 = vunpack.c.l.b16 %v142
    %v179 = vunpack.c.l.b16 %v143
    %v180 = vunpack.c.l.b16 %v144
    %v181 = vunpack.c.l.b16 %v145
    %v182 = vunpack.c.l.b16 %v146
    %v183 = vunpack.c.l.b16 %v147
    %v184 = vunpack.c.l.b16 %v148
    %v185 = vunpack.c.l.b16 %v149
    %v186 = vunpack.c.l.b16 %v150
    %v187 = vunpack.c.l.b16 %v151
    %v188 = vunpack.c.l.b16 %v152
    %v189 = vunpack.c.l.b16 %v153
    %v190 = vunpack.c.l.b16 %v154
    %v191 = vpack.c.b16 %v176, %v175
    %v192 = vpack.c.b16 %v178, %v177
    %v193 = vpack.c.b16 %v180, %v179
    %v194 = vpack.c.b16 %v182, %v181
    %v195 = vpack.c.b16 %v184, %v183
    %v196 = vpack.c.b16 %v186, %v185
    %v197 = vpack.c.b16 %v188, %v187
    %v198 = vpack.c.b16 %v190, %v189
    %207 = vmatprep.subr.bf16.mxu0 0
    %208 = vmatpush1.bf16.msra.mxu0 %v191
    %209 = vmatprep.subr.bf16.mxu0 0
    %210 = vmatpush1.bf16.msra.mxu0 %v192
    %211 = vmatprep.subr.bf16.mxu0 0
    %212 = vmatpush1.bf16.msra.mxu0 %v193
    %213 = vmatprep.subr.bf16.mxu0 0
    %214 = vmatpush1.bf16.msra.mxu0 %v194
    %215 = vmatprep.subr.bf16.mxu0 0
    %216 = vmatpush1.bf16.msra.mxu0 %v195
    %217 = vmatprep.subr.bf16.mxu0 0
    %218 = vmatpush1.bf16.msra.mxu0 %v196
    %219 = vmatprep.subr.bf16.mxu0 0
    %220 = vmatpush1.bf16.msra.mxu0 %v197
    %221 = vmatprep.subr.bf16.mxu0 0
    %222 = vmatpush1.bf16.msra.mxu0 %v198
    %223 = vmatprep.subr.bf16.mxu0 0
    %224 = vmatpush1.bf16.msra.mxu0 0
    %225 = vmatprep.subr.bf16.mxu0 0
    %226 = vmatpush1.bf16.msra.mxu0 0
    %227 = vmatprep.subr.bf16.mxu0 0
    %228 = vmatpush1.bf16.msra.mxu0 0
    %229 = vmatprep.subr.bf16.mxu0 0
    %230 = vmatpush1.bf16.msra.mxu0 0
    %231 = vmatprep.subr.bf16.mxu0 0
    %232 = vmatpush1.bf16.msra.mxu0 0
    %233 = vmatprep.subr.bf16.mxu0 0
    %234 = vmatpush1.bf16.msra.mxu0 0
    %235 = vmatprep.subr.bf16.mxu0 0
    %236 = vmatpush1.bf16.msra.mxu0 0
    %237 = vmatprep.subr.bf16.mxu0 0
    %238 = vmatpush1.bf16.msra.mxu0 0
    %239 = vmatprep.mubr.bf16.mxu0 0
    %240 = vmatmul.mubr.bf16.gmra.mrb[0].mxu0 %v138
    %v241 = vpop.f32.mrb[0].mxu0
    %v242 = vadd.f32 %v158, %v241
    %v243 = vpop.f32.mrb[0].mxu0
    %v244 = vpop.f32.mrb[0].mxu0
    %v245 = vpop.f32.mrb[0].mxu0
    %246 = vdwg.mxu0
    %v247 = vpack.c.bf16 %v242, %v242
    %v248 = vtanh.bf16.pop %v247
    %s249 = scalar_lea.vmem [#allocation6], 64
    %v250 = vld [vmem:[%s249] sm:$0xf]
    %v251 = vld [vmem:[%s249 + $0x4] sm:$0xf]
    %v252 = vld [vmem:[%s249 + $0x8] sm:$0xf]
    %v253 = vld [vmem:[%s249 + $0xc] sm:$0xf]
    %v254 = vld [vmem:[%s249 + $0x10] sm:$0xf]
    %v255 = vld [vmem:[%s249 + $0x14] sm:$0xf]
    %v256 = vld [vmem:[%s249 + $0x18] sm:$0xf]
    %v257 = vld [vmem:[%s249 + $0x1c] sm:$0xf]
    %v258 = vld [vmem:[%s249 + $0x20] sm:$0xf]
    %v259 = vld [vmem:[%s249 + $0x24] sm:$0xf]
    %v260 = vld [vmem:[%s249 + $0x28] sm:$0xf]
    %v261 = vld [vmem:[%s249 + $0x2c] sm:$0xf]
    %v262 = vld [vmem:[%s249 + $0x30] sm:$0xf]
    %v263 = vld [vmem:[%s249 + $0x34] sm:$0xf]
    %v264 = vld [vmem:[%s249 + $0x38] sm:$0xf]
    %v265 = vld [vmem:[%s249 + $0x3c] sm:$0xf]
    %v266 = vlaneseq
    %v267 = vshrl.u32 %v266, 7
    %v268 = vsub.s32 2, %v267
    %v269 = vrot.slane %v72, %v268
    %v286 = vunpack.c.l.b16 %v250
    %v287 = vunpack.c.l.b16 %v251
    %v288 = vunpack.c.l.b16 %v252
    %v289 = vunpack.c.l.b16 %v253
    %v290 = vunpack.c.l.b16 %v254
    %v291 = vunpack.c.l.b16 %v255
    %v292 = vunpack.c.l.b16 %v256
    %v293 = vunpack.c.l.b16 %v257
    %v294 = vunpack.c.l.b16 %v258
    %v295 = vunpack.c.l.b16 %v259
    %v296 = vunpack.c.l.b16 %v260
    %v297 = vunpack.c.l.b16 %v261
    %v298 = vunpack.c.l.b16 %v262
    %v299 = vunpack.c.l.b16 %v263
    %v300 = vunpack.c.l.b16 %v264
    %v301 = vunpack.c.l.b16 %v265
    %v302 = vpack.c.b16 %v287, %v286
    %v303 = vpack.c.b16 %v289, %v288
    %v304 = vpack.c.b16 %v291, %v290
    %v305 = vpack.c.b16 %v293, %v292
    %v306 = vpack.c.b16 %v295, %v294
    %v307 = vpack.c.b16 %v297, %v296
    %v308 = vpack.c.b16 %v299, %v298
    %v309 = vpack.c.b16 %v301, %v300
    %318 = vmatprep.subr.bf16.mxu0 0
    %319 = vmatpush1.bf16.msra.mxu0 %v302
    %320 = vmatprep.subr.bf16.mxu0 0
    %321 = vmatpush1.bf16.msra.mxu0 %v303
    %322 = vmatprep.subr.bf16.mxu0 0
    %323 = vmatpush1.bf16.msra.mxu0 %v304
    %324 = vmatprep.subr.bf16.mxu0 0
    %325 = vmatpush1.bf16.msra.mxu0 %v305
    %326 = vmatprep.subr.bf16.mxu0 0
    %327 = vmatpush1.bf16.msra.mxu0 %v306
    %328 = vmatprep.subr.bf16.mxu0 0
    %329 = vmatpush1.bf16.msra.mxu0 %v307
    %330 = vmatprep.subr.bf16.mxu0 0
    %331 = vmatpush1.bf16.msra.mxu0 %v308
    %332 = vmatprep.subr.bf16.mxu0 0
    %333 = vmatpush1.bf16.msra.mxu0 %v309
    %334 = vmatprep.subr.bf16.mxu0 0
    %335 = vmatpush1.bf16.msra.mxu0 0
    %336 = vmatprep.subr.bf16.mxu0 0
    %337 = vmatpush1.bf16.msra.mxu0 0
    %338 = vmatprep.subr.bf16.mxu0 0
    %339 = vmatpush1.bf16.msra.mxu0 0
    %340 = vmatprep.subr.bf16.mxu0 0
    %341 = vmatpush1.bf16.msra.mxu0 0
    %342 = vmatprep.subr.bf16.mxu0 0
    %343 = vmatpush1.bf16.msra.mxu0 0
    %344 = vmatprep.subr.bf16.mxu0 0
    %345 = vmatpush1.bf16.msra.mxu0 0
    %346 = vmatprep.subr.bf16.mxu0 0
    %347 = vmatpush1.bf16.msra.mxu0 0
    %348 = vmatprep.subr.bf16.mxu0 0
    %349 = vmatpush1.bf16.msra.mxu0 0
    %350 = vmatprep.mubr.bf16.mxu0 0
    %351 = vmatmul.mubr.bf16.gmra.mrb[0].mxu0 %v248
    %v352 = vpop.f32.mrb[0].mxu0
    %v353 = vadd.f32 %v269, %v352
    %v354 = vpop.f32.mrb[0].mxu0
    %v355 = vpop.f32.mrb[0].mxu0
    %v356 = vpop.f32.mrb[0].mxu0
    %357 = vdwg.mxu0
    %v358 = vpack.c.bf16 %v353, %v353
    %v359 = vtanh.bf16.pop %v358
    %s360 = scalar_lea.vmem [#allocation6], 128
    %v361 = vld [vmem:[%s360] sm:$0xf]
    %v362 = vld [vmem:[%s360 + $0x4] sm:$0xf]
    %v363 = vld [vmem:[%s360 + $0x8] sm:$0xf]
    %v364 = vld [vmem:[%s360 + $0xc] sm:$0xf]
    %v365 = vld [vmem:[%s360 + $0x10] sm:$0xf]
    %v366 = vld [vmem:[%s360 + $0x14] sm:$0xf]
    %v367 = vld [vmem:[%s360 + $0x18] sm:$0xf]
    %v368 = vld [vmem:[%s360 + $0x1c] sm:$0xf]
    %v369 = vld [vmem:[%s360 + $0x20] sm:$0xf]
    %v370 = vld [vmem:[%s360 + $0x24] sm:$0xf]
    %v371 = vld [vmem:[%s360 + $0x28] sm:$0xf]
    %v372 = vld [vmem:[%s360 + $0x2c] sm:$0xf]
    %v373 = vld [vmem:[%s360 + $0x30] sm:$0xf]
    %v374 = vld [vmem:[%s360 + $0x34] sm:$0xf]
    %v375 = vld [vmem:[%s360 + $0x38] sm:$0xf]
    %v376 = vld [vmem:[%s360 + $0x3c] sm:$0xf]
    %v377 = vlaneseq
    %v378 = vshrl.u32 %v377, 7
    %v379 = vsub.s32 3, %v378
    %v380 = vrot.slane %v72, %v379
    %v397 = vunpack.c.l.b16 %v361
    %v398 = vunpack.c.l.b16 %v362
    %v399 = vunpack.c.l.b16 %v363
    %v400 = vunpack.c.l.b16 %v364
    %v401 = vunpack.c.l.b16 %v365
    %v402 = vunpack.c.l.b16 %v366
    %v403 = vunpack.c.l.b16 %v367
    %v404 = vunpack.c.l.b16 %v368
    %v405 = vunpack.c.l.b16 %v369
    %v406 = vunpack.c.l.b16 %v370
    %v407 = vunpack.c.l.b16 %v371
    %v408 = vunpack.c.l.b16 %v372
    %v409 = vunpack.c.l.b16 %v373
    %v410 = vunpack.c.l.b16 %v374
    %v411 = vunpack.c.l.b16 %v375
    %v412 = vunpack.c.l.b16 %v376
    %v413 = vpack.c.b16 %v398, %v397
    %v414 = vpack.c.b16 %v400, %v399
    %v415 = vpack.c.b16 %v402, %v401
    %v416 = vpack.c.b16 %v404, %v403
    %v417 = vpack.c.b16 %v406, %v405
    %v418 = vpack.c.b16 %v408, %v407
    %v419 = vpack.c.b16 %v410, %v409
    %v420 = vpack.c.b16 %v412, %v411
    %429 = vmatprep.subr.bf16.mxu0 0
    %430 = vmatpush1.bf16.msra.mxu0 %v413
    %431 = vmatprep.subr.bf16.mxu0 0
    %432 = vmatpush1.bf16.msra.mxu0 %v414
    %433 = vmatprep.subr.bf16.mxu0 0
    %434 = vmatpush1.bf16.msra.mxu0 %v415
    %435 = vmatprep.subr.bf16.mxu0 0
    %436 = vmatpush1.bf16.msra.mxu0 %v416
    %437 = vmatprep.subr.bf16.mxu0 0
    %438 = vmatpush1.bf16.msra.mxu0 %v417
    %439 = vmatprep.subr.bf16.mxu0 0
    %440 = vmatpush1.bf16.msra.mxu0 %v418
    %441 = vmatprep.subr.bf16.mxu0 0
    %442 = vmatpush1.bf16.msra.mxu0 %v419
    %443 = vmatprep.subr.bf16.mxu0 0
    %444 = vmatpush1.bf16.msra.mxu0 %v420
    %445 = vmatprep.subr.bf16.mxu0 0
    %446 = vmatpush1.bf16.msra.mxu0 0
    %447 = vmatprep.subr.bf16.mxu0 0
    %448 = vmatpush1.bf16.msra.mxu0 0
    %449 = vmatprep.subr.bf16.mxu0 0
    %450 = vmatpush1.bf16.msra.mxu0 0
    %451 = vmatprep.subr.bf16.mxu0 0
    %452 = vmatpush1.bf16.msra.mxu0 0
    %453 = vmatprep.subr.bf16.mxu0 0
    %454 = vmatpush1.bf16.msra.mxu0 0
    %455 = vmatprep.subr.bf16.mxu0 0
    %456 = vmatpush1.bf16.msra.mxu0 0
    %457 = vmatprep.subr.bf16.mxu0 0
    %458 = vmatpush1.bf16.msra.mxu0 0
    %459 = vmatprep.subr.bf16.mxu0 0
    %460 = vmatpush1.bf16.msra.mxu0 0
    %461 = vmatprep.mubr.bf16.mxu0 0
    %462 = vmatmul.mubr.bf16.gmra.mrb[0].mxu0 %v359
    %v463 = vpop.f32.mrb[0].mxu0
    %v464 = vadd.f32 %v380, %v463
    %v465 = vpop.f32.mrb[0].mxu0
    %v466 = vpop.f32.mrb[0].mxu0
    %v467 = vpop.f32.mrb[0].mxu0
    %468 = vdwg.mxu0
    %v469 = vpack.c.bf16 %v464, %v464
    %v470 = vtanh.bf16.pop %v469
    %s471 = scalar_lea.vmem [#allocation6], 192
    %v472 = vld [vmem:[%s471] sm:$0xf]
    %v473 = vld [vmem:[%s471 + $0x4] sm:$0xf]
    %v474 = vld [vmem:[%s471 + $0x8] sm:$0xf]
    %v475 = vld [vmem:[%s471 + $0xc] sm:$0xf]
    %v476 = vld [vmem:[%s471 + $0x10] sm:$0xf]
    %v477 = vld [vmem:[%s471 + $0x14] sm:$0xf]
    %v478 = vld [vmem:[%s471 + $0x18] sm:$0xf]
    %v479 = vld [vmem:[%s471 + $0x1c] sm:$0xf]
    %v480 = vld [vmem:[%s471 + $0x20] sm:$0xf]
    %v481 = vld [vmem:[%s471 + $0x24] sm:$0xf]
    %v482 = vld [vmem:[%s471 + $0x28] sm:$0xf]
    %v483 = vld [vmem:[%s471 + $0x2c] sm:$0xf]
    %v484 = vld [vmem:[%s471 + $0x30] sm:$0xf]
    %v485 = vld [vmem:[%s471 + $0x34] sm:$0xf]
    %v486 = vld [vmem:[%s471 + $0x38] sm:$0xf]
    %v487 = vld [vmem:[%s471 + $0x3c] sm:$0xf]
    %v488 = vlaneseq
    %v489 = vshrl.u32 %v488, 7
    %v490 = vsub.s32 4, %v489
    %v491 = vrot.slane %v72, %v490
    %v508 = vunpack.c.l.b16 %v472
    %v509 = vunpack.c.l.b16 %v473
    %v510 = vunpack.c.l.b16 %v474
    %v511 = vunpack.c.l.b16 %v475
    %v512 = vunpack.c.l.b16 %v476
    %v513 = vunpack.c.l.b16 %v477
    %v514 = vunpack.c.l.b16 %v478
    %v515 = vunpack.c.l.b16 %v479
    %v516 = vunpack.c.l.b16 %v480
    %v517 = vunpack.c.l.b16 %v481
    %v518 = vunpack.c.l.b16 %v482
    %v519 = vunpack.c.l.b16 %v483
    %v520 = vunpack.c.l.b16 %v484
    %v521 = vunpack.c.l.b16 %v485
    %v522 = vunpack.c.l.b16 %v486
    %v523 = vunpack.c.l.b16 %v487
    %v524 = vpack.c.b16 %v509, %v508
    %v525 = vpack.c.b16 %v511, %v510
    %v526 = vpack.c.b16 %v513, %v512
    %v527 = vpack.c.b16 %v515, %v514
    %v528 = vpack.c.b16 %v517, %v516
    %v529 = vpack.c.b16 %v519, %v518
    %v530 = vpack.c.b16 %v521, %v520
    %v531 = vpack.c.b16 %v523, %v522
    %540 = vmatprep.subr.bf16.mxu0 0
    %541 = vmatpush1.bf16.msra.mxu0 %v524
    %542 = vmatprep.subr.bf16.mxu0 0
    %543 = vmatpush1.bf16.msra.mxu0 %v525
    %544 = vmatprep.subr.bf16.mxu0 0
    %545 = vmatpush1.bf16.msra.mxu0 %v526
    %546 = vmatprep.subr.bf16.mxu0 0
    %547 = vmatpush1.bf16.msra.mxu0 %v527
    %548 = vmatprep.subr.bf16.mxu0 0
    %549 = vmatpush1.bf16.msra.mxu0 %v528
    %550 = vmatprep.subr.bf16.mxu0 0
    %551 = vmatpush1.bf16.msra.mxu0 %v529
    %552 = vmatprep.subr.bf16.mxu0 0
    %553 = vmatpush1.bf16.msra.mxu0 %v530
    %554 = vmatprep.subr.bf16.mxu0 0
    %555 = vmatpush1.bf16.msra.mxu0 %v531
    %556 = vmatprep.subr.bf16.mxu0 0
    %557 = vmatpush1.bf16.msra.mxu0 0
    %558 = vmatprep.subr.bf16.mxu0 0
    %559 = vmatpush1.bf16.msra.mxu0 0
    %560 = vmatprep.subr.bf16.mxu0 0
    %561 = vmatpush1.bf16.msra.mxu0 0
    %562 = vmatprep.subr.bf16.mxu0 0
    %563 = vmatpush1.bf16.msra.mxu0 0
    %564 = vmatprep.subr.bf16.mxu0 0
    %565 = vmatpush1.bf16.msra.mxu0 0
    %566 = vmatprep.subr.bf16.mxu0 0
    %567 = vmatpush1.bf16.msra.mxu0 0
    %568 = vmatprep.subr.bf16.mxu0 0
    %569 = vmatpush1.bf16.msra.mxu0 0
    %570 = vmatprep.subr.bf16.mxu0 0
    %571 = vmatpush1.bf16.msra.mxu0 0
    %572 = vmatprep.mubr.bf16.mxu0 0
    %573 = vmatmul.mubr.bf16.gmra.mrb[0].mxu0 %v470
    %v574 = vpop.f32.mrb[0].mxu0
    %v575 = vadd.f32 %v491, %v574
    %v576 = vpop.f32.mrb[0].mxu0
    %v577 = vpop.f32.mrb[0].mxu0
    %v578 = vpop.f32.mrb[0].mxu0
    %579 = vdwg.mxu0
    %580 = vst [vmem:[%s4] sm:$0xff] %v575
    // Predicated region
    $region30: #{build_network_small_forward.1} parent=1 // pred_check
      _
    $region31: #{build_network_small_forward.1} parent=1 // pred_check_branch
      %582 = sbr.rel (0) target = $region33
    $region32: #{build_network_small_forward.1} parent=1 // pred_region
      _
    $region33: #{build_network_small_forward.1} parent=1 // pred_fallthru
      _
    // Predicated region
    $region34: #{build_network_small_forward.1} parent=1 // pred_check
      _
    $region35: #{build_network_small_forward.1} parent=1 // pred_check_branch
      %584 = sbr.rel (0) target = $region37
    $region36: #{build_network_small_forward.1} parent=1 // pred_region
      _
    $region37: #{build_network_small_forward.1} parent=1 // pred_fallthru
      _
    %585 = vsyncpa [#allocation3], 1
    %586 = vsyncpa [#allocation5], 1

</llo_original>
